<compile_context>
chip_gen: v6e
topology: v6e:2x2x1
jax: 0.10.0
libtpu: 0.0.40
codegen_flags: <defaults>
</compile_context>

<pallas_src>
import numpy as np
import jax
import jax.numpy as jnp
from jax import lax
from jax.experimental import pallas as pl
from jax.experimental.pallas import tpu as pltpu

# ---- problem sizes (consistent with the module) ------------------------------
N, C_IN, H, W = 2, 4, 16, 16
C_OUT, KH, KW = 8, 3, 3
STRIDE, PAD = 1, 0
OH = (H + 2 * PAD - KH) // STRIDE + 1        # 14
OW = (W + 2 * PAD - KW) // STRIDE + 1        # 14
HW = H * W                                   # 256 over-computed columns / image
NP = N * HW                                  # 512 total over-computed columns
M = N * OH * OW                              # 392 valid output positions
C_PAD = 8                                    # C_IN padded so scratch blocks are 8 sublanes
K = KH * KW * C_PAD                          # 72 = contraction depth of the single dot
BN_EPS = 1e-5

# Host-precomputed validity mask over the flattened (n, h, w) columns:
# keep h < OH and w < OW (identical pattern per image, tiled N times).
_p = np.arange(HW)
_valid = ((_p // W) < OH) & ((_p % W) < OW)
_MASK_NP = np.tile(_valid.astype(np.float32), N).reshape(1, NP)


# ---- Pallas kernel: fused im2col-conv + batchnorm(+relu), single MXU dot ------
def conv_bn_relu_kernel(x_ref, w_ref, p_ref, mask_ref, o_ref, patch_ref):
    # x_ref:     (N, C_PAD, HW)   images, channels zero-padded 4 -> 8
    # w_ref:     (C_OUT, K)       tap-major / channel-minor weight matrix
    # p_ref:     (C_OUT, 2)       col 0 = gamma, col 1 = beta
    # mask_ref:  (1, NP)          1.0 at valid output columns, else 0.0
    # o_ref:     (N, C_OUT, HW)   conv+BN+ReLU (invalid columns over-computed)
    # patch_ref: (K, NP)          VMEM scratch: im2col patch matrix
    for n in range(N):
        x_n = x_ref[n]                                   # (C_PAD, HW)
        for kh in range(KH):
            for kw in range(KW):
                off = kh * W + kw
                t = kh * KW + kw
                if off == 0:
                    shifted = x_n
                else:
                    # result[:, j] = x_n[:, (j + off) % HW]; wrapped lanes only
                    # reach columns with oh >= OH, which are masked/discarded.
                    shifted = pltpu.roll(x_n, shift=HW - off, axis=1)
                patch_ref[t * C_PAD:(t + 1) * C_PAD, n * HW:(n + 1) * HW] = shifted

    # One MXU matmul: (C_OUT, K) x (K, NP) -> (C_OUT, NP), f32 accumulation.
    acc = jnp.dot(w_ref[...], patch_ref[...], preferred_element_type=jnp.float32)

    # BatchNorm2d, training-mode batch statistics (biased variance), computed
    # only over the M = N*OH*OW valid columns.
    mask = mask_ref[...]                                 # (1, NP)
    inv_m = 1.0 / float(M)
    acc_m = acc * mask
    mean = jnp.sum(acc_m, axis=1, keepdims=True) * inv_m            # (C_OUT, 1)
    var = jnp.sum(acc_m * acc, axis=1, keepdims=True) * inv_m - mean * mean

    gamma = p_ref[:, 0:1]
    beta = p_ref[:, 1:2]
    scale = gamma * lax.rsqrt(var + BN_EPS)                          # (C_OUT, 1)
    shift = beta - mean * scale
    y = jnp.maximum(acc * scale + shift, 0.0).astype(o_ref.dtype)    # (C_OUT, NP)
    for n in range(N):
        o_ref[n] = y[:, n * HW:(n + 1) * HW]


# ---- wrapper ------------------------------------------------------------------
@jax.jit
def conv_block_forward(x_nchw, w_oihw, bias, gamma, beta):
    # `bias` is accepted for signature fidelity but is mathematically cancelled
    # by the train-mode BatchNorm mean subtraction, so it never enters the kernel.
    del bias

    # (N, C_IN, H, W) -> (N, C_IN, H*W) is a free reshape; pad channels to C_PAD
    # so in-kernel scratch writes are sublane-aligned 8-row blocks.
    x_k = jnp.pad(x_nchw.reshape(N, C_IN, HW),
                  ((0, 0), (0, C_PAD - C_IN), (0, 0)))               # (N, C_PAD, HW)

    # (C_OUT, C_IN, KH, KW) -> (C_OUT, KH, KW, C_PAD) -> (C_OUT, K):
    # flat K index = (kh*KW + kw)*C_PAD + c, matching the scratch row layout.
    w_k = jnp.pad(jnp.transpose(w_oihw, (0, 2, 3, 1)),
                  ((0, 0), (0, 0), (0, 0), (0, C_PAD - C_IN)))
    w_k = w_k.reshape(C_OUT, K)

    bn_params = jnp.stack([gamma, beta], axis=1)                     # (C_OUT, 2)
    valid_mask = jnp.asarray(_MASK_NP)                               # (1, NP)

    vmem = pl.BlockSpec(memory_space=pltpu.MemorySpace.VMEM)
    y = pl.pallas_call(
        conv_bn_relu_kernel,
        out_shape=jax.ShapeDtypeStruct((N, C_OUT, HW), x_nchw.dtype),
        in_specs=[vmem, vmem, vmem, vmem],
        out_specs=vmem,
        scratch_shapes=[pltpu.VMEM((K, NP), jnp.float32)],
    )(x_k, w_k, bn_params, valid_mask)

    # Drop the over-computed columns: reshape + static slice, no transpose.
    return y.reshape(N, C_OUT, H, W)[:, :, :OH, :OW]                 # (N, C_OUT, OH, OW)


# ---- pure-JAX reference for a sanity check -------------------------------------
def reference(x_nchw, w_oihw, bias, gamma, beta):
    y = lax.conv_general_dilated(
        x_nchw, w_oihw, (STRIDE, STRIDE), "VALID",
        dimension_numbers=("NCHW", "OIHW", "NCHW"),
        precision=lax.Precision.HIGHEST,
    )
    y = y + bias.reshape(1, C_OUT, 1, 1)
    mean = jnp.mean(y, axis=(0, 2, 3), keepdims=True)
    var = jnp.mean((y - mean) ** 2, axis=(0, 2, 3), keepdims=True)
    y = (y - mean) * lax.rsqrt(var + BN_EPS)
    y = y * gamma.reshape(1, C_OUT, 1, 1) + beta.reshape(1, C_OUT, 1, 1)
    return jnp.maximum(y, 0.0)


if __name__ == "__main__":
    key = jax.random.PRNGKey(0)
    kx, kw, kb, kg, kbeta = jax.random.split(key, 5)

    # PyTorch-style uniform bounds for Conv2d; gamma/beta slightly perturbed so
    # the affine-BN path is actually exercised by the check.
    fan_in = C_IN * KH * KW
    bound = 1.0 / (fan_in ** 0.5)
    x = jax.random.normal(kx, (N, C_IN, H, W), dtype=jnp.float32)
    weight = jax.random.uniform(kw, (C_OUT, C_IN, KH, KW),
                                minval=-bound, maxval=bound, dtype=jnp.float32)
    bias = jax.random.uniform(kb, (C_OUT,),
                              minval=-bound, maxval=bound, dtype=jnp.float32)
    gamma = 1.0 + 0.1 * jax.random.normal(kg, (C_OUT,), dtype=jnp.float32)
    beta = 0.1 * jax.random.normal(kbeta, (C_OUT,), dtype=jnp.float32)

    out = conv_block_forward(x, weight, bias, gamma, beta)
    jax.block_until_ready(out)

    ref = reference(x, weight, bias, gamma, beta)
    assert out.shape == (N, C_OUT, OH, OW), out.shape
    max_err = float(jnp.max(jnp.abs(out - ref)))
    # Tolerance covers the default-precision (bf16-input) MXU dot in the kernel.
    assert jnp.allclose(out, ref, rtol=5e-3, atol=5e-3), max_err

    print("KERNEL_OK")
</pallas_src>

<mosaic_0001>
module attributes {stable_mosaic.version = 11 : i64} {
  func.func @conv_bn_relu_kernel(%arg0: memref<2x8x256xf32, #tpu.memory_space<vmem>>, %arg1: memref<8x72xf32, #tpu.memory_space<vmem>>, %arg2: memref<8x2xf32, #tpu.memory_space<vmem>>, %arg3: memref<1x512xf32, #tpu.memory_space<vmem>>, %arg4: memref<2x8x256xf32, #tpu.memory_space<vmem>>, %arg5: memref<72x512xf32, #tpu.memory_space<vmem>>) attributes {dimension_semantics = [], scalar_prefetch = 0 : i64, scratch_operands = 1 : i64, tpu.core_type = #tpu.core_type<tc>} {
    %c0 = arith.constant 0 : index
    %c0_0 = arith.constant 0 : index
    %c0_1 = arith.constant 0 : index
    %0 = vector.load %arg0[%c0, %c0_0, %c0_1] : memref<2x8x256xf32, #tpu.memory_space<vmem>>, vector<1x8x256xf32>
    %1 = vector.shape_cast %0 : vector<1x8x256xf32> to vector<8x256xf32>
    %c0_2 = arith.constant 0 : index
    %c0_3 = arith.constant 0 : index
    %2 = vector.load %arg5[%c0_2, %c0_3] : memref<72x512xf32, #tpu.memory_space<vmem>>, vector<8x256xf32>
    tpu.vector_store %arg5[%c0_2, %c0_3], %1 {strides = array<i32>} : memref<72x512xf32, #tpu.memory_space<vmem>>, vector<8x256xf32>,
    %c255_i32 = arith.constant 255 : i32
    %3 = tpu.dynamic_rotate %1 by %c255_i32 dim 1 : vector<8x256xf32>, i32 -> vector<8x256xf32>
    %c8 = arith.constant 8 : index
    %c0_4 = arith.constant 0 : index
    %4 = vector.load %arg5[%c8, %c0_4] : memref<72x512xf32, #tpu.memory_space<vmem>>, vector<8x256xf32>
    tpu.vector_store %arg5[%c8, %c0_4], %3 {strides = array<i32>} : memref<72x512xf32, #tpu.memory_space<vmem>>, vector<8x256xf32>,
    %c254_i32 = arith.constant 254 : i32
    %5 = tpu.dynamic_rotate %1 by %c254_i32 dim 1 : vector<8x256xf32>, i32 -> vector<8x256xf32>
    %c16 = arith.constant 16 : index
    %c0_5 = arith.constant 0 : index
    %6 = vector.load %arg5[%c16, %c0_5] : memref<72x512xf32, #tpu.memory_space<vmem>>, vector<8x256xf32>
    tpu.vector_store %arg5[%c16, %c0_5], %5 {strides = array<i32>} : memref<72x512xf32, #tpu.memory_space<vmem>>, vector<8x256xf32>,
    %c240_i32 = arith.constant 240 : i32
    %7 = tpu.dynamic_rotate %1 by %c240_i32 dim 1 : vector<8x256xf32>, i32 -> vector<8x256xf32>
    %c24 = arith.constant 24 : index
    %c0_6 = arith.constant 0 : index
    %8 = vector.load %arg5[%c24, %c0_6] : memref<72x512xf32, #tpu.memory_space<vmem>>, vector<8x256xf32>
    tpu.vector_store %arg5[%c24, %c0_6], %7 {strides = array<i32>} : memref<72x512xf32, #tpu.memory_space<vmem>>, vector<8x256xf32>,
    %c239_i32 = arith.constant 239 : i32
    %9 = tpu.dynamic_rotate %1 by %c239_i32 dim 1 : vector<8x256xf32>, i32 -> vector<8x256xf32>
    %c32 = arith.constant 32 : index
    %c0_7 = arith.constant 0 : index
    %10 = vector.load %arg5[%c32, %c0_7] : memref<72x512xf32, #tpu.memory_space<vmem>>, vector<8x256xf32>
    tpu.vector_store %arg5[%c32, %c0_7], %9 {strides = array<i32>} : memref<72x512xf32, #tpu.memory_space<vmem>>, vector<8x256xf32>,
    %c238_i32 = arith.constant 238 : i32
    %11 = tpu.dynamic_rotate %1 by %c238_i32 dim 1 : vector<8x256xf32>, i32 -> vector<8x256xf32>
    %c40 = arith.constant 40 : index
    %c0_8 = arith.constant 0 : index
    %12 = vector.load %arg5[%c40, %c0_8] : memref<72x512xf32, #tpu.memory_space<vmem>>, vector<8x256xf32>
    tpu.vector_store %arg5[%c40, %c0_8], %11 {strides = array<i32>} : memref<72x512xf32, #tpu.memory_space<vmem>>, vector<8x256xf32>,
    %c224_i32 = arith.constant 224 : i32
    %13 = tpu.dynamic_rotate %1 by %c224_i32 dim 1 : vector<8x256xf32>, i32 -> vector<8x256xf32>
    %c48 = arith.constant 48 : index
    %c0_9 = arith.constant 0 : index
    %14 = vector.load %arg5[%c48, %c0_9] : memref<72x512xf32, #tpu.memory_space<vmem>>, vector<8x256xf32>
    tpu.vector_store %arg5[%c48, %c0_9], %13 {strides = array<i32>} : memref<72x512xf32, #tpu.memory_space<vmem>>, vector<8x256xf32>,
    %c223_i32 = arith.constant 223 : i32
    %15 = tpu.dynamic_rotate %1 by %c223_i32 dim 1 : vector<8x256xf32>, i32 -> vector<8x256xf32>
    %c56 = arith.constant 56 : index
    %c0_10 = arith.constant 0 : index
    %16 = vector.load %arg5[%c56, %c0_10] : memref<72x512xf32, #tpu.memory_space<vmem>>, vector<8x256xf32>
    tpu.vector_store %arg5[%c56, %c0_10], %15 {strides = array<i32>} : memref<72x512xf32, #tpu.memory_space<vmem>>, vector<8x256xf32>,
    %c222_i32 = arith.constant 222 : i32
    %17 = tpu.dynamic_rotate %1 by %c222_i32 dim 1 : vector<8x256xf32>, i32 -> vector<8x256xf32>
    %c64 = arith.constant 64 : index
    %c0_11 = arith.constant 0 : index
    %18 = vector.load %arg5[%c64, %c0_11] : memref<72x512xf32, #tpu.memory_space<vmem>>, vector<8x256xf32>
    tpu.vector_store %arg5[%c64, %c0_11], %17 {strides = array<i32>} : memref<72x512xf32, #tpu.memory_space<vmem>>, vector<8x256xf32>,
    %c1 = arith.constant 1 : index
    %c0_12 = arith.constant 0 : index
    %c0_13 = arith.constant 0 : index
    %19 = vector.load %arg0[%c1, %c0_12, %c0_13] : memref<2x8x256xf32, #tpu.memory_space<vmem>>, vector<1x8x256xf32>
    %20 = vector.shape_cast %19 : vector<1x8x256xf32> to vector<8x256xf32>
    %c0_14 = arith.constant 0 : index
    %c256 = arith.constant 256 : index
    %21 = vector.load %arg5[%c0_14, %c256] : memref<72x512xf32, #tpu.memory_space<vmem>>, vector<8x256xf32>
    tpu.vector_store %arg5[%c0_14, %c256], %20 {strides = array<i32>} : memref<72x512xf32, #tpu.memory_space<vmem>>, vector<8x256xf32>,
    %c255_i32_15 = arith.constant 255 : i32
    %22 = tpu.dynamic_rotate %20 by %c255_i32_15 dim 1 : vector<8x256xf32>, i32 -> vector<8x256xf32>
    %c8_16 = arith.constant 8 : index
    %c256_17 = arith.constant 256 : index
    %23 = vector.load %arg5[%c8_16, %c256_17] : memref<72x512xf32, #tpu.memory_space<vmem>>, vector<8x256xf32>
    tpu.vector_store %arg5[%c8_16, %c256_17], %22 {strides = array<i32>} : memref<72x512xf32, #tpu.memory_space<vmem>>, vector<8x256xf32>,
    %c254_i32_18 = arith.constant 254 : i32
    %24 = tpu.dynamic_rotate %20 by %c254_i32_18 dim 1 : vector<8x256xf32>, i32 -> vector<8x256xf32>
    %c16_19 = arith.constant 16 : index
    %c256_20 = arith.constant 256 : index
    %25 = vector.load %arg5[%c16_19, %c256_20] : memref<72x512xf32, #tpu.memory_space<vmem>>, vector<8x256xf32>
    tpu.vector_store %arg5[%c16_19, %c256_20], %24 {strides = array<i32>} : memref<72x512xf32, #tpu.memory_space<vmem>>, vector<8x256xf32>,
    %c240_i32_21 = arith.constant 240 : i32
    %26 = tpu.dynamic_rotate %20 by %c240_i32_21 dim 1 : vector<8x256xf32>, i32 -> vector<8x256xf32>
    %c24_22 = arith.constant 24 : index
    %c256_23 = arith.constant 256 : index
    %27 = vector.load %arg5[%c24_22, %c256_23] : memref<72x512xf32, #tpu.memory_space<vmem>>, vector<8x256xf32>
    tpu.vector_store %arg5[%c24_22, %c256_23], %26 {strides = array<i32>} : memref<72x512xf32, #tpu.memory_space<vmem>>, vector<8x256xf32>,
    %c239_i32_24 = arith.constant 239 : i32
    %28 = tpu.dynamic_rotate %20 by %c239_i32_24 dim 1 : vector<8x256xf32>, i32 -> vector<8x256xf32>
    %c32_25 = arith.constant 32 : index
    %c256_26 = arith.constant 256 : index
    %29 = vector.load %arg5[%c32_25, %c256_26] : memref<72x512xf32, #tpu.memory_space<vmem>>, vector<8x256xf32>
    tpu.vector_store %arg5[%c32_25, %c256_26], %28 {strides = array<i32>} : memref<72x512xf32, #tpu.memory_space<vmem>>, vector<8x256xf32>,
    %c238_i32_27 = arith.constant 238 : i32
    %30 = tpu.dynamic_rotate %20 by %c238_i32_27 dim 1 : vector<8x256xf32>, i32 -> vector<8x256xf32>
    %c40_28 = arith.constant 40 : index
    %c256_29 = arith.constant 256 : index
    %31 = vector.load %arg5[%c40_28, %c256_29] : memref<72x512xf32, #tpu.memory_space<vmem>>, vector<8x256xf32>
    tpu.vector_store %arg5[%c40_28, %c256_29], %30 {strides = array<i32>} : memref<72x512xf32, #tpu.memory_space<vmem>>, vector<8x256xf32>,
    %c224_i32_30 = arith.constant 224 : i32
    %32 = tpu.dynamic_rotate %20 by %c224_i32_30 dim 1 : vector<8x256xf32>, i32 -> vector<8x256xf32>
    %c48_31 = arith.constant 48 : index
    %c256_32 = arith.constant 256 : index
    %33 = vector.load %arg5[%c48_31, %c256_32] : memref<72x512xf32, #tpu.memory_space<vmem>>, vector<8x256xf32>
    tpu.vector_store %arg5[%c48_31, %c256_32], %32 {strides = array<i32>} : memref<72x512xf32, #tpu.memory_space<vmem>>, vector<8x256xf32>,
    %c223_i32_33 = arith.constant 223 : i32
    %34 = tpu.dynamic_rotate %20 by %c223_i32_33 dim 1 : vector<8x256xf32>, i32 -> vector<8x256xf32>
    %c56_34 = arith.constant 56 : index
    %c256_35 = arith.constant 256 : index
    %35 = vector.load %arg5[%c56_34, %c256_35] : memref<72x512xf32, #tpu.memory_space<vmem>>, vector<8x256xf32>
    tpu.vector_store %arg5[%c56_34, %c256_35], %34 {strides = array<i32>} : memref<72x512xf32, #tpu.memory_space<vmem>>, vector<8x256xf32>,
    %c222_i32_36 = arith.constant 222 : i32
    %36 = tpu.dynamic_rotate %20 by %c222_i32_36 dim 1 : vector<8x256xf32>, i32 -> vector<8x256xf32>
    %c64_37 = arith.constant 64 : index
    %c256_38 = arith.constant 256 : index
    %37 = vector.load %arg5[%c64_37, %c256_38] : memref<72x512xf32, #tpu.memory_space<vmem>>, vector<8x256xf32>
    tpu.vector_store %arg5[%c64_37, %c256_38], %36 {strides = array<i32>} : memref<72x512xf32, #tpu.memory_space<vmem>>, vector<8x256xf32>,
    %c0_39 = arith.constant 0 : index
    %c0_40 = arith.constant 0 : index
    %38 = vector.load %arg1[%c0_39, %c0_40] : memref<8x72xf32, #tpu.memory_space<vmem>>, vector<8x72xf32>
    %c0_41 = arith.constant 0 : index
    %c0_42 = arith.constant 0 : index
    %39 = vector.load %arg5[%c0_41, %c0_42] : memref<72x512xf32, #tpu.memory_space<vmem>>, vector<72x512xf32>
    %cst = arith.constant dense<0.000000e+00> : vector<8x512xf32>
    %40 = tpu.matmul %38, %39, %cst {dimension_numbers = #tpu.dot_dimension_numbers<[1], [0], [0], [1], [0, 0, 1, 1], [], []>} : vector<8x72xf32>, vector<72x512xf32>, vector<8x512xf32> -> vector<8x512xf32>
    %c0_43 = arith.constant 0 : index
    %c0_44 = arith.constant 0 : index
    %41 = vector.load %arg3[%c0_43, %c0_44] : memref<1x512xf32, #tpu.memory_space<vmem>>, vector<1x512xf32>
    %42 = vector.broadcast %41 : vector<1x512xf32> to vector<8x512xf32>
    %43 = arith.mulf %40, %42 : vector<8x512xf32>
    %cst_45 = arith.constant dense<0.000000e+00> : vector<8xf32>
    %44 = vector.multi_reduction <add>, %43, %cst_45 [1] : vector<8x512xf32> to vector<8xf32>
    %45 = vector.shape_cast %44 : vector<8xf32> to vector<8x1xf32>
    %cst_46 = arith.constant 0.00255102036 : f32
    %46 = vector.broadcast %cst_46 : f32 to vector<8x1xf32>
    %47 = arith.mulf %45, %46 : vector<8x1xf32>
    %48 = arith.mulf %43, %40 : vector<8x512xf32>
    %cst_47 = arith.constant dense<0.000000e+00> : vector<8xf32>
    %49 = vector.multi_reduction <add>, %48, %cst_47 [1] : vector<8x512xf32> to vector<8xf32>
    %50 = vector.shape_cast %49 : vector<8xf32> to vector<8x1xf32>
    %cst_48 = arith.constant 0.00255102036 : f32
    %51 = vector.broadcast %cst_48 : f32 to vector<8x1xf32>
    %52 = arith.mulf %50, %51 : vector<8x1xf32>
    %53 = arith.mulf %47, %47 : vector<8x1xf32>
    %54 = arith.subf %52, %53 : vector<8x1xf32>
    %c0_49 = arith.constant 0 : index
    %c0_50 = arith.constant 0 : index
    %55 = vector.load %arg2[%c0_49, %c0_50] : memref<8x2xf32, #tpu.memory_space<vmem>>, vector<8x1xf32>
    %c0_51 = arith.constant 0 : index
    %c1_52 = arith.constant 1 : index
    %56 = vector.load %arg2[%c0_51, %c1_52] : memref<8x2xf32, #tpu.memory_space<vmem>>, vector<8x1xf32>
    %cst_53 = arith.constant 9.99999974E-6 : f32
    %57 = vector.broadcast %cst_53 : f32 to vector<8x1xf32>
    %58 = arith.addf %54, %57 : vector<8x1xf32>
    %59 = math.rsqrt %58 : vector<8x1xf32>
    %60 = arith.mulf %55, %59 : vector<8x1xf32>
    %61 = arith.mulf %47, %60 : vector<8x1xf32>
    %62 = arith.subf %56, %61 : vector<8x1xf32>
    %63 = vector.broadcast %60 : vector<8x1xf32> to vector<8x512xf32>
    %64 = arith.mulf %40, %63 : vector<8x512xf32>
    %65 = vector.broadcast %62 : vector<8x1xf32> to vector<8x512xf32>
    %66 = arith.addf %64, %65 : vector<8x512xf32>
    %cst_54 = arith.constant 0.000000e+00 : f32
    %67 = vector.broadcast %cst_54 : f32 to vector<8x512xf32>
    %68 = arith.maximumf %66, %67 : vector<8x512xf32>
    %69 = vector.extract_strided_slice %68 {offsets = [0, 0], sizes = [8, 256], strides = [1, 1]} : vector<8x512xf32> to vector<8x256xf32>
    %c0_55 = arith.constant 0 : index
    %c0_56 = arith.constant 0 : index
    %c0_57 = arith.constant 0 : index
    %70 = vector.load %arg4[%c0_55, %c0_56, %c0_57] : memref<2x8x256xf32, #tpu.memory_space<vmem>>, vector<1x8x256xf32>
    %71 = vector.shape_cast %70 : vector<1x8x256xf32> to vector<8x256xf32>
    %72 = vector.shape_cast %69 : vector<8x256xf32> to vector<1x8x256xf32>
    tpu.vector_store %arg4[%c0_55, %c0_56, %c0_57], %72 {strides = array<i32>} : memref<2x8x256xf32, #tpu.memory_space<vmem>>, vector<1x8x256xf32>,
    %73 = vector.extract_strided_slice %68 {offsets = [0, 256], sizes = [8, 256], strides = [1, 1]} : vector<8x512xf32> to vector<8x256xf32>
    %c1_58 = arith.constant 1 : index
    %c0_59 = arith.constant 0 : index
    %c0_60 = arith.constant 0 : index
    %74 = vector.load %arg4[%c1_58, %c0_59, %c0_60] : memref<2x8x256xf32, #tpu.memory_space<vmem>>, vector<1x8x256xf32>
    %75 = vector.shape_cast %74 : vector<1x8x256xf32> to vector<8x256xf32>
    %76 = vector.shape_cast %73 : vector<8x256xf32> to vector<1x8x256xf32>
    tpu.vector_store %arg4[%c1_58, %c0_59, %c0_60], %76 {strides = array<i32>} : memref<2x8x256xf32, #tpu.memory_space<vmem>>, vector<1x8x256xf32>,
    return
  }
}

</mosaic_0001>

<llo_original>
// kernel: conv_block_forward.1
$region0: #{conv_block_forward.1}
  #allocation0 [shape = 'u32[]', space=smem, size = 0x4, offset = 0x4, fixed_abs, tag = 'smem constant byte address 0x4 - core index']
  #allocation1 [shape = 'u32[144,128]{1,0:T(1,128)}', space=vmem, size = 0x12000, scoped, tag = 'internal scratch']
  #allocation2 [shape = 'f32[72,512]{1,0:T(8,128)}', space=vmem, size = 0x24000, scoped, tag = 'scratch operand']
  %s0 = inlined_call_operand.vmem [shape: f32[2,8,256], index: 0, kind: input, shape index: {}]
  %s1 = inlined_call_operand.vmem [shape: f32[8,72], index: 1, kind: input, shape index: {}]
  %s2 = inlined_call_operand.vmem [shape: f32[8,2], index: 2, kind: input, shape index: {}]
  %s3 = inlined_call_operand.vmem [shape: f32[1,512], index: 3, kind: input, shape index: {}]
  %s4 = inlined_call_operand.vmem [shape: f32[2,8,256], index: 4, kind: output, shape index: {}]
  %s5 = sld [smem:[#allocation0]]
  $region26: #{conv_block_forward.1} parent=0
    _
  %s7 = ssub.s32 1, %s5
  %s8 = scalar_select 0, %s7, %s5
  // Predicated region
  $region2: #{conv_block_forward.1} parent=0 // pred_check
    _
  $region3: #{conv_block_forward.1} parent=0 // pred_check_branch
    %10 = sbr.rel (0) target = $region5
  $region4: #{conv_block_forward.1} parent=0 // pred_region
    _
  $region5: #{conv_block_forward.1} parent=0 // pred_fallthru
    _
  // Predicated region
  $region6: #{conv_block_forward.1} parent=0 // pred_check
    _
  $region7: #{conv_block_forward.1} parent=0 // pred_check_branch
    %12 = sbr.rel (0) target = $region9
  $region8: #{conv_block_forward.1} parent=0 // pred_region
    _
  $region9: #{conv_block_forward.1} parent=0 // pred_fallthru
    _
  // Predicated region
  $region10: #{conv_block_forward.1} parent=0 // pred_check
    _
  $region11: #{conv_block_forward.1} parent=0 // pred_check_branch
    %14 = sbr.rel (0) target = $region13
  $region12: #{conv_block_forward.1} parent=0 // pred_region
    _
  $region13: #{conv_block_forward.1} parent=0 // pred_fallthru
    _
  // Predicated region
  $region14: #{conv_block_forward.1} parent=0 // pred_check
    _
  $region15: #{conv_block_forward.1} parent=0 // pred_check_branch
    %16 = sbr.rel (0) target = $region17
  $region16: #{conv_block_forward.1} parent=0 // pred_region
    _
  $region17: #{conv_block_forward.1} parent=0 // pred_fallthru
    _
  %v17 = vld [vmem:[%s0] sm:$0xff]
  %v18 = vld [vmem:[%s0 + $0x8] sm:$0xff]
  %19 = vst [vmem:[#allocation2] sm:$0xff] %v17
  %20 = vst [vmem:[#allocation2 + $0x8] sm:$0xff] %v18
  %21 = vrot.lane.b32.xlu0 %v17, 127
  %v22 = vpop.permute.xlu0 %21
  %23 = vrot.lane.b32.xlu0 %v18, 127
  %v24 = vpop.permute.xlu0 %23
  %v25 = vlaneseq
  %v26 = vand.u32 %v25, 127
  %vm27 = vcmp.lt.s32.totalorder %v26, 127
  %v28 = vsel %vm27, %v22, %v24
  %v29 = vsel %vm27, %v24, %v22
  %30 = vst [vmem:[#allocation2 + $0x20] sm:$0xff] %v28
  %31 = vst [vmem:[#allocation2 + $0x28] sm:$0xff] %v29
  %32 = vrot.lane.b32.xlu0 %v17, 126
  %v33 = vpop.permute.xlu0 %32
  %34 = vrot.lane.b32.xlu0 %v18, 126
  %v35 = vpop.permute.xlu0 %34
  %vm36 = vcmp.lt.s32.totalorder %v26, 126
  %v37 = vsel %vm36, %v33, %v35
  %v38 = vsel %vm36, %v35, %v33
  %39 = vst [vmem:[#allocation2 + $0x40] sm:$0xff] %v37
  %40 = vst [vmem:[#allocation2 + $0x48] sm:$0xff] %v38
  %41 = vrot.lane.b32.xlu0 %v17, 112
  %v42 = vpop.permute.xlu0 %41
  %43 = vrot.lane.b32.xlu0 %v18, 112
  %v44 = vpop.permute.xlu0 %43
  %vm45 = vcmp.lt.s32.totalorder %v26, 112
  %v46 = vsel %vm45, %v42, %v44
  %v47 = vsel %vm45, %v44, %v42
  %48 = vst [vmem:[#allocation2 + $0x60] sm:$0xff] %v46
  %49 = vst [vmem:[#allocation2 + $0x68] sm:$0xff] %v47
  %50 = vrot.lane.b32.xlu0 %v17, 111
  %v51 = vpop.permute.xlu0 %50
  %52 = vrot.lane.b32.xlu0 %v18, 111
  %v53 = vpop.permute.xlu0 %52
  %vm54 = vcmp.lt.s32.totalorder %v26, 111
  %v55 = vsel %vm54, %v51, %v53
  %v56 = vsel %vm54, %v53, %v51
  %57 = vst [vmem:[#allocation2 + $0x80] sm:$0xff] %v55
  %58 = vst [vmem:[#allocation2 + $0x88] sm:$0xff] %v56
  %59 = vrot.lane.b32.xlu0 %v17, 110
  %v60 = vpop.permute.xlu0 %59
  %61 = vrot.lane.b32.xlu0 %v18, 110
  %v62 = vpop.permute.xlu0 %61
  %vm63 = vcmp.lt.s32.totalorder %v26, 110
  %v64 = vsel %vm63, %v60, %v62
  %v65 = vsel %vm63, %v62, %v60
  %66 = vst [vmem:[#allocation2 + $0xa0] sm:$0xff] %v64
  %67 = vst [vmem:[#allocation2 + $0xa8] sm:$0xff] %v65
  %68 = vrot.lane.b32.xlu0 %v17, 96
  %v69 = vpop.permute.xlu0 %68
  %70 = vrot.lane.b32.xlu0 %v18, 96
  %v71 = vpop.permute.xlu0 %70
  %vm72 = vcmp.lt.s32.totalorder %v26, 96
  %v73 = vsel %vm72, %v69, %v71
  %v74 = vsel %vm72, %v71, %v69
  %75 = vst [vmem:[#allocation2 + $0xc0] sm:$0xff] %v73
  %76 = vst [vmem:[#allocation2 + $0xc8] sm:$0xff] %v74
  %77 = vrot.lane.b32.xlu0 %v17, 95
  %v78 = vpop.permute.xlu0 %77
  %79 = vrot.lane.b32.xlu0 %v18, 95
  %v80 = vpop.permute.xlu0 %79
  %vm81 = vcmp.lt.s32.totalorder %v26, 95
  %v82 = vsel %vm81, %v78, %v80
  %v83 = vsel %vm81, %v80, %v78
  %84 = vst [vmem:[#allocation2 + $0xe0] sm:$0xff] %v82
  %85 = vst [vmem:[#allocation2 + $0xe8] sm:$0xff] %v83
  %86 = vrot.lane.b32.xlu0 %v17, 94
  %v87 = vpop.permute.xlu0 %86
  %88 = vrot.lane.b32.xlu0 %v18, 94
  %v89 = vpop.permute.xlu0 %88
  %vm90 = vcmp.lt.s32.totalorder %v26, 94
  %v91 = vsel %vm90, %v87, %v89
  %v92 = vsel %vm90, %v89, %v87
  %93 = vst [vmem:[#allocation2 + $0x100] sm:$0xff] %v91
  %94 = vst [vmem:[#allocation2 + $0x108] sm:$0xff] %v92
  %s95 = scalar_lea.vmem %s0, 16
  %v96 = vld [vmem:[%s95] sm:$0xff]
  %v97 = vld [vmem:[%s95 + $0x8] sm:$0xff]
  %98 = vst [vmem:[#allocation2 + $0x10] sm:$0xff] %v96
  %99 = vst [vmem:[#allocation2 + $0x18] sm:$0xff] %v97
  %100 = vrot.lane.b32.xlu0 %v96, 127
  %v101 = vpop.permute.xlu0 %100
  %102 = vrot.lane.b32.xlu0 %v97, 127
  %v103 = vpop.permute.xlu0 %102
  %v104 = vsel %vm27, %v101, %v103
  %v105 = vsel %vm27, %v103, %v101
  %106 = vst [vmem:[#allocation2 + $0x30] sm:$0xff] %v104
  %107 = vst [vmem:[#allocation2 + $0x38] sm:$0xff] %v105
  %108 = vrot.lane.b32.xlu0 %v96, 126
  %v109 = vpop.permute.xlu0 %108
  %110 = vrot.lane.b32.xlu0 %v97, 126
  %v111 = vpop.permute.xlu0 %110
  %v112 = vsel %vm36, %v109, %v111
  %v113 = vsel %vm36, %v111, %v109
  %114 = vst [vmem:[#allocation2 + $0x50] sm:$0xff] %v112
  %115 = vst [vmem:[#allocation2 + $0x58] sm:$0xff] %v113
  %116 = vrot.lane.b32.xlu0 %v96, 112
  %v117 = vpop.permute.xlu0 %116
  %118 = vrot.lane.b32.xlu0 %v97, 112
  %v119 = vpop.permute.xlu0 %118
  %v120 = vsel %vm45, %v117, %v119
  %v121 = vsel %vm45, %v119, %v117
  %122 = vst [vmem:[#allocation2 + $0x70] sm:$0xff] %v120
  %123 = vst [vmem:[#allocation2 + $0x78] sm:$0xff] %v121
  %124 = vrot.lane.b32.xlu0 %v96, 111
  %v125 = vpop.permute.xlu0 %124
  %126 = vrot.lane.b32.xlu0 %v97, 111
  %v127 = vpop.permute.xlu0 %126
  %v128 = vsel %vm54, %v125, %v127
  %v129 = vsel %vm54, %v127, %v125
  %130 = vst [vmem:[#allocation2 + $0x90] sm:$0xff] %v128
  %131 = vst [vmem:[#allocation2 + $0x98] sm:$0xff] %v129
  %132 = vrot.lane.b32.xlu0 %v96, 110
  %v133 = vpop.permute.xlu0 %132
  %134 = vrot.lane.b32.xlu0 %v97, 110
  %v135 = vpop.permute.xlu0 %134
  %v136 = vsel %vm63, %v133, %v135
  %v137 = vsel %vm63, %v135, %v133
  %138 = vst [vmem:[#allocation2 + $0xb0] sm:$0xff] %v136
  %139 = vst [vmem:[#allocation2 + $0xb8] sm:$0xff] %v137
  %140 = vrot.lane.b32.xlu0 %v96, 96
  %v141 = vpop.permute.xlu0 %140
  %142 = vrot.lane.b32.xlu0 %v97, 96
  %v143 = vpop.permute.xlu0 %142
  %v144 = vsel %vm72, %v141, %v143
  %v145 = vsel %vm72, %v143, %v141
  %146 = vst [vmem:[#allocation2 + $0xd0] sm:$0xff] %v144
  %147 = vst [vmem:[#allocation2 + $0xd8] sm:$0xff] %v145
  %148 = vrot.lane.b32.xlu0 %v96, 95
  %v149 = vpop.permute.xlu0 %148
  %150 = vrot.lane.b32.xlu0 %v97, 95
  %v151 = vpop.permute.xlu0 %150
  %v152 = vsel %vm81, %v149, %v151
  %v153 = vsel %vm81, %v151, %v149
  %154 = vst [vmem:[#allocation2 + $0xf0] sm:$0xff] %v152
  %155 = vst [vmem:[#allocation2 + $0xf8] sm:$0xff] %v153
  %156 = vrot.lane.b32.xlu0 %v96, 94
  %v157 = vpop.permute.xlu0 %156
  %158 = vrot.lane.b32.xlu0 %v97, 94
  %v159 = vpop.permute.xlu0 %158
  %v160 = vsel %vm90, %v157, %v159
  %v161 = vsel %vm90, %v159, %v157
  %162 = vst [vmem:[#allocation2 + $0x110] sm:$0xff] %v160
  %163 = vst [vmem:[#allocation2 + $0x118] sm:$0xff] %v161
  %v164 = vld [vmem:[%s1] sm:$0xff]
  %v165 = vld [vmem:[#allocation2] sm:$0xff]
  %v166 = vld [vmem:[#allocation2 + $0x8] sm:$0xff]
  %v167 = vld [vmem:[#allocation2 + $0x10] sm:$0xff]
  %v168 = vld [vmem:[#allocation2 + $0x18] sm:$0xff]
  %v169 = vld [vmem:[#allocation2 + $0x20] sm:$0xff]
  %v170 = vld [vmem:[#allocation2 + $0x28] sm:$0xff]
  %v171 = vld [vmem:[#allocation2 + $0x30] sm:$0xff]
  %v172 = vld [vmem:[#allocation2 + $0x38] sm:$0xff]
  %v173 = vld [vmem:[#allocation2 + $0x40] sm:$0xff]
  %v174 = vld [vmem:[#allocation2 + $0x48] sm:$0xff]
  %v175 = vld [vmem:[#allocation2 + $0x50] sm:$0xff]
  %v176 = vld [vmem:[#allocation2 + $0x58] sm:$0xff]
  %v177 = vld [vmem:[#allocation2 + $0x60] sm:$0xff]
  %v178 = vld [vmem:[#allocation2 + $0x68] sm:$0xff]
  %v179 = vld [vmem:[#allocation2 + $0x70] sm:$0xff]
  %v180 = vld [vmem:[#allocation2 + $0x78] sm:$0xff]
  %v181 = vld [vmem:[#allocation2 + $0x80] sm:$0xff]
  %v182 = vld [vmem:[#allocation2 + $0x88] sm:$0xff]
  %v183 = vld [vmem:[#allocation2 + $0x90] sm:$0xff]
  %v184 = vld [vmem:[#allocation2 + $0x98] sm:$0xff]
  %v185 = vld [vmem:[#allocation2 + $0xa0] sm:$0xff]
  %v186 = vld [vmem:[#allocation2 + $0xa8] sm:$0xff]
  %v187 = vld [vmem:[#allocation2 + $0xb0] sm:$0xff]
  %v188 = vld [vmem:[#allocation2 + $0xb8] sm:$0xff]
  %v189 = vld [vmem:[#allocation2 + $0xc0] sm:$0xff]
  %v190 = vld [vmem:[#allocation2 + $0xc8] sm:$0xff]
  %v191 = vld [vmem:[#allocation2 + $0xd0] sm:$0xff]
  %v192 = vld [vmem:[#allocation2 + $0xd8] sm:$0xff]
  %v193 = vld [vmem:[#allocation2 + $0xe0] sm:$0xff]
  %v194 = vld [vmem:[#allocation2 + $0xe8] sm:$0xff]
  %v195 = vld [vmem:[#allocation2 + $0xf0] sm:$0xff]
  %v196 = vld [vmem:[#allocation2 + $0xf8] sm:$0xff]
  %v197 = vld [vmem:[#allocation2 + $0x100] sm:$0xff]
  %v198 = vld [vmem:[#allocation2 + $0x108] sm:$0xff]
  %v199 = vld [vmem:[#allocation2 + $0x110] sm:$0xff]
  %v200 = vld [vmem:[#allocation2 + $0x118] sm:$0xff]
  %vm201 = vcmask 588800
  %v203 = vsel %vm201, %v164, 0
  %205 = vmatprep.subr.mxu0 0.0
  %206 = vmatpush1.msra.mxu0 0.0
  %207 = vmatprep.subr.mxu0 0.0
  %208 = vmatpush1.msra.mxu0 0.0
  %209 = vmatprep.subr.mxu0 0.0
  %210 = vmatpush1.msra.mxu0 0.0
  %211 = vmatprep.subr.mxu0 0.0
  %212 = vmatpush1.msra.mxu0 0.0
  %213 = vmatprep.subr.mxu0 0.0
  %214 = vmatpush1.msra.mxu0 0.0
  %215 = vmatprep.subr.mxu0 0.0
  %216 = vmatpush1.msra.mxu0 0.0
  %217 = vmatprep.subr.mxu0 0.0
  %218 = vmatpush1.msra.mxu0 0.0
  %219 = vmatprep.subr.mxu0 %v198
  %220 = vmatpush1.msra.mxu0 %v197
  %221 = vmatprep.subr.mxu0 %v194
  %222 = vmatpush1.msra.mxu0 %v193
  %223 = vmatprep.subr.mxu0 %v190
  %224 = vmatpush1.msra.mxu0 %v189
  %225 = vmatprep.subr.mxu0 %v186
  %226 = vmatpush1.msra.mxu0 %v185
  %227 = vmatprep.subr.mxu0 %v182
  %228 = vmatpush1.msra.mxu0 %v181
  %229 = vmatprep.subr.mxu0 %v178
  %230 = vmatpush1.msra.mxu0 %v177
  %231 = vmatprep.subr.mxu0 %v174
  %232 = vmatpush1.msra.mxu0 %v173
  %233 = vmatprep.subr.mxu0 %v170
  %234 = vmatpush1.msra.mxu0 %v169
  %235 = vmatprep.subr.mxu0 %v166
  %236 = vmatpush1.msra.mxu0 %v165
  %237 = vmatprep.subr.mxu0 0.0
  %238 = vmatpush2.msra.mxu0 0.0
  %239 = vmatprep.subr.mxu0 0.0
  %240 = vmatpush2.msra.mxu0 0.0
  %241 = vmatprep.subr.mxu0 0.0
  %242 = vmatpush2.msra.mxu0 0.0
  %243 = vmatprep.subr.mxu0 0.0
  %244 = vmatpush2.msra.mxu0 0.0
  %245 = vmatprep.subr.mxu0 0.0
  %246 = vmatpush2.msra.mxu0 0.0
  %247 = vmatprep.subr.mxu0 0.0
  %248 = vmatpush2.msra.mxu0 0.0
  %249 = vmatprep.subr.mxu0 0.0
  %250 = vmatpush2.msra.mxu0 0.0
  %251 = vmatprep.subr.mxu0 0.0
  %252 = vmatpush2.msra.mxu0 0.0
  %253 = vmatprep.subr.mxu0 0.0
  %254 = vmatpush2.msra.mxu0 0.0
  %255 = vmatprep.subr.mxu0 0.0
  %256 = vmatpush2.msra.mxu0 0.0
  %257 = vmatprep.subr.mxu0 0.0
  %258 = vmatpush2.msra.mxu0 0.0
  %259 = vmatprep.subr.mxu0 0.0
  %260 = vmatpush2.msra.mxu0 0.0
  %261 = vmatprep.subr.mxu0 0.0
  %262 = vmatpush2.msra.mxu0 0.0
  %263 = vmatprep.subr.mxu0 0.0
  %264 = vmatpush2.msra.mxu0 0.0
  %265 = vmatprep.subr.mxu0 0.0
  %266 = vmatpush2.msra.mxu0 0.0
  %267 = vmatprep.subr.mxu0 0.0
  %268 = vmatpush2.msra.mxu0 0.0
  %269 = vmatprep.mubr.f32.mxu0 0.0
  %270 = vmatmul.mubr.f32.gmra.mxu0 %v203
  %v271 = vpop.f32.mrf.mxu0
  %v272 = vadd.f32 0.0, %v271
  %v273 = vpop.f32.mrf.mxu0
  %v274 = vadd.f32 0.0, %v273
  %275 = vdwg.mxu0
  %276 = vmatprep.subr.mxu0 0.0
  %277 = vmatpush1.msra.mxu0 0.0
  %278 = vmatprep.subr.mxu0 0.0
  %279 = vmatpush1.msra.mxu0 0.0
  %280 = vmatprep.subr.mxu0 0.0
  %281 = vmatpush1.msra.mxu0 0.0
  %282 = vmatprep.subr.mxu0 0.0
  %283 = vmatpush1.msra.mxu0 0.0
  %284 = vmatprep.subr.mxu0 0.0
  %285 = vmatpush1.msra.mxu0 0.0
  %286 = vmatprep.subr.mxu0 0.0
  %287 = vmatpush1.msra.mxu0 0.0
  %288 = vmatprep.subr.mxu0 0.0
  %289 = vmatpush1.msra.mxu0 0.0
  %290 = vmatprep.subr.mxu0 %v200
  %291 = vmatpush1.msra.mxu0 %v199
  %292 = vmatprep.subr.mxu0 %v196
  %293 = vmatpush1.msra.mxu0 %v195
  %294 = vmatprep.subr.mxu0 %v192
  %295 = vmatpush1.msra.mxu0 %v191
  %296 = vmatprep.subr.mxu0 %v188
  %297 = vmatpush1.msra.mxu0 %v187
  %298 = vmatprep.subr.mxu0 %v184
  %299 = vmatpush1.msra.mxu0 %v183
  %300 = vmatprep.subr.mxu0 %v180
  %301 = vmatpush1.msra.mxu0 %v179
  %302 = vmatprep.subr.mxu0 %v176
  %303 = vmatpush1.msra.mxu0 %v175
  %304 = vmatprep.subr.mxu0 %v172
  %305 = vmatpush1.msra.mxu0 %v171
  %306 = vmatprep.subr.mxu0 %v168
  %307 = vmatpush1.msra.mxu0 %v167
  %308 = vmatprep.subr.mxu0 0.0
  %309 = vmatpush2.msra.mxu0 0.0
  %310 = vmatprep.subr.mxu0 0.0
  %311 = vmatpush2.msra.mxu0 0.0
  %312 = vmatprep.subr.mxu0 0.0
  %313 = vmatpush2.msra.mxu0 0.0
  %314 = vmatprep.subr.mxu0 0.0
  %315 = vmatpush2.msra.mxu0 0.0
  %316 = vmatprep.subr.mxu0 0.0
  %317 = vmatpush2.msra.mxu0 0.0
  %318 = vmatprep.subr.mxu0 0.0
  %319 = vmatpush2.msra.mxu0 0.0
  %320 = vmatprep.subr.mxu0 0.0
  %321 = vmatpush2.msra.mxu0 0.0
  %322 = vmatprep.subr.mxu0 0.0
  %323 = vmatpush2.msra.mxu0 0.0
  %324 = vmatprep.subr.mxu0 0.0
  %325 = vmatpush2.msra.mxu0 0.0
  %326 = vmatprep.subr.mxu0 0.0
  %327 = vmatpush2.msra.mxu0 0.0
  %328 = vmatprep.subr.mxu0 0.0
  %329 = vmatpush2.msra.mxu0 0.0
  %330 = vmatprep.subr.mxu0 0.0
  %331 = vmatpush2.msra.mxu0 0.0
  %332 = vmatprep.subr.mxu0 0.0
  %333 = vmatpush2.msra.mxu0 0.0
  %334 = vmatprep.subr.mxu0 0.0
  %335 = vmatpush2.msra.mxu0 0.0
  %336 = vmatprep.subr.mxu0 0.0
  %337 = vmatpush2.msra.mxu0 0.0
  %338 = vmatprep.subr.mxu0 0.0
  %339 = vmatpush2.msra.mxu0 0.0
  %340 = vmatprep.mubr.f32.mxu0 0.0
  %341 = vmatmul.mubr.f32.gmra.mxu0 %v203
  %v342 = vpop.f32.mrf.mxu0
  %v343 = vadd.f32 0.0, %v342
  %v344 = vpop.f32.mrf.mxu0
  %v345 = vadd.f32 0.0, %v344
  %346 = vdwg.mxu0
  %v347 = vld [vmem:[%s3] sm:$0xf]
  %v349 = vlaneseq
  %v350 = vshrl.u32 %v349, 7
  %v351 = vsub.s32 0, %v350
  %v352 = vrot.slane %v347, %v351
  %v353 = vlaneseq
  %v354 = vshrl.u32 %v353, 7
  %v355 = vsub.s32 1, %v354
  %v356 = vrot.slane %v347, %v355
  %v357 = vlaneseq
  %v358 = vshrl.u32 %v357, 7
  %v359 = vsub.s32 2, %v358
  %v360 = vrot.slane %v347, %v359
  %v361 = vlaneseq
  %v362 = vshrl.u32 %v361, 7
  %v363 = vsub.s32 3, %v362
  %v364 = vrot.slane %v347, %v363
  %v369 = vmul.f32 %v272, %v352
  %v370 = vmul.f32 %v274, %v356
  %v371 = vmul.f32 %v343, %v360
  %v372 = vmul.f32 %v345, %v364
  %v373 = vadd.f32 %v369, %v370
  %v374 = vadd.f32 %v373, %v371
  %v375 = vadd.f32 %v374, %v372
  %376 = vadd.xlane.f32.xlu0 %v375
  %v377 = vpop.xlane.xlu0 %376
  %v378 = vmul.f32 %v377, 0.0025510204
  %v379 = vmul.f32 %v369, %v272
  %v380 = vmul.f32 %v370, %v274
  %v381 = vmul.f32 %v371, %v343
  %v382 = vmul.f32 %v372, %v345
  %v383 = vadd.f32 %v379, %v380
  %v384 = vadd.f32 %v383, %v381
  %v385 = vadd.f32 %v384, %v382
  %386 = vadd.xlane.f32.xlu0 %v385
  %v387 = vpop.xlane.xlu0 %386
  %v388 = vmul.f32 %v387, 0.0025510204
  %v389 = vmul.f32 %v378, %v378
  %v390 = vsub.f32 %v388, %v389
  %v391 = vld [vmem:[%s2] sm:$0xff]
  %v392 = vadd.f32 %v390, 1e-05
  %v393 = vrsqrt.pop %v392
  %v394 = vmul.f32 %v391, %v393
  %v395 = vmul.f32 %v378, %v394
  %397 = vrot.lane.b32.xlu0 %v395, 1
  %v398 = vpop.permute.xlu0 %397
  %v400 = vsub.f32 %v391, %v398
  %402 = vset.pattern.permute.xlu0 0
  %403 = vperm.xlu0 %402, %v394
  %v404 = vpop.permute.xlu0 %403
  %v406 = vmul.f32 %v272, %v404
  %v407 = vmul.f32 %v274, %v404
  %v408 = vmul.f32 %v343, %v404
  %v409 = vmul.f32 %v345, %v404
  %411 = vset.pattern.permute.xlu0 1
  %412 = vperm.xlu0 %411, %v400
  %v413 = vpop.permute.xlu0 %412
  %v415 = vadd.f32 %v406, %v413
  %v416 = vadd.f32 %v407, %v413
  %v417 = vadd.f32 %v408, %v413
  %v418 = vadd.f32 %v409, %v413
  %v419 = vmax.f32 %v415, 0.0
  %v420 = vmax.f32 %v416, 0.0
  %v421 = vmax.f32 %v417, 0.0
  %v422 = vmax.f32 %v418, 0.0
  %423 = vst [vmem:[%s4] sm:$0xff] %v419
  %424 = vst [vmem:[%s4 + $0x8] sm:$0xff] %v420
  %s425 = scalar_lea.vmem %s4, 16
  %426 = vst [vmem:[%s425] sm:$0xff] %v421
  %427 = vst [vmem:[%s425 + $0x8] sm:$0xff] %v422
  // Predicated region
  $region18: #{conv_block_forward.1} parent=0 // pred_check
    _
  $region19: #{conv_block_forward.1} parent=0 // pred_check_branch
    %429 = sbr.rel (0) target = $region21
  $region20: #{conv_block_forward.1} parent=0 // pred_region
    _
  $region21: #{conv_block_forward.1} parent=0 // pred_fallthru
    _
  // Predicated region
  $region22: #{conv_block_forward.1} parent=0 // pred_check
    _
  $region23: #{conv_block_forward.1} parent=0 // pred_check_branch
    %431 = sbr.rel (0) target = $region25
  $region24: #{conv_block_forward.1} parent=0 // pred_region
    _
  $region25: #{conv_block_forward.1} parent=0 // pred_fallthru
    _

</llo_original>
